<compile_context>
chip_gen: v5e
topology: v5e:2x2
jax: 0.10.0
libtpu: 0.0.40
codegen_flags: <defaults>
</compile_context>

<pallas_src>
import functools

import jax
import jax.numpy as jnp
from jax.experimental import pallas as pl
from jax.experimental.pallas import tpu as pltpu


def _round_up(x, m):
    return ((x + m - 1) // m) * m


def mlp_kernel(x_ref, w1_ref, b1_ref, w2_ref, b2_ref, w3_ref, b3_ref, o_ref):
    # MXU operands in bf16, accumulation + elementwise (bias, sigmoid) in f32.
    x = x_ref[...].astype(jnp.bfloat16)

    # Layer 1: Linear + Sigmoid
    h1 = jnp.dot(x, w1_ref[...], preferred_element_type=jnp.float32)
    h1 = jax.nn.sigmoid(h1 + b1_ref[...])

    # Layer 2: Linear + Sigmoid
    h2 = jnp.dot(h1.astype(jnp.bfloat16), w2_ref[...],
                 preferred_element_type=jnp.float32)
    h2 = jax.nn.sigmoid(h2 + b2_ref[...])

    # Layer 3: Linear + Sigmoid
    h3 = jnp.dot(h2.astype(jnp.bfloat16), w3_ref[...],
                 preferred_element_type=jnp.float32)
    o_ref[...] = jax.nn.sigmoid(h3 + b3_ref[...]).astype(o_ref.dtype)


@functools.partial(jax.jit, static_argnames=("tm",))
def mlp_pallas(x, w1, b1, w2, b2, w3, b3, *, tm=128):
    B, in_dim = x.shape
    inter_dim = w1.shape[1]
    out_dim = w3.shape[1]

    # --- Lane-dense output: pad out_dim up to a multiple of 128 (sliced off below).
    out_pad = _round_up(out_dim, 128)
    if out_pad != out_dim:
        w3 = jnp.pad(w3, ((0, 0), (0, out_pad - out_dim)))
        b3 = jnp.pad(b3, ((0, 0), (0, out_pad - out_dim)))

    # --- Batch tile: multiple of 8 sublanes, capped at 128 (MXU-edge friendly on all gens).
    tm = min(tm, _round_up(B, 8))
    b_padded = _round_up(B, tm)
    if b_padded != B:
        x = jnp.pad(x, ((0, b_padded - B), (0, 0)))
    grid = (b_padded // tm,)

    # --- bf16 weights for the MXU (halves weight DMA bytes too); biases stay f32.
    w1b = w1.astype(jnp.bfloat16)
    w2b = w2.astype(jnp.bfloat16)
    w3b = w3.astype(jnp.bfloat16)

    # --- VMEM budget: actual resident footprint, doubled for pipelining buffers,
    #     plus headroom. Never request anywhere near v7x's 64 MiB total.
    block_bytes = (
        tm * in_dim * 4                       # x tile (f32)
        + tm * out_pad * 4                    # out tile (f32)
        + (in_dim * inter_dim
           + inter_dim * inter_dim
           + inter_dim * out_pad) * 2         # bf16 weights
        + (2 * inter_dim + out_pad) * 4       # f32 biases
    )
    vmem_limit = int(min(max(2 * block_bytes + (4 << 20), 4 << 20), 48 << 20))

    flops = 2 * b_padded * (in_dim * inter_dim
                            + inter_dim * inter_dim
                            + inter_dim * out_pad)
    transcendentals = b_padded * (2 * inter_dim + out_pad)
    bytes_accessed = (
        b_padded * in_dim * 4
        + b_padded * out_pad * 4
        + (in_dim * inter_dim + inter_dim * inter_dim + inter_dim * out_pad) * 2
        + (2 * inter_dim + out_pad) * 4
    )

    def resident(shape):
        # Weights/biases: same block for every grid step -> DMA once, stay in VMEM.
        return pl.BlockSpec(shape, lambda i: tuple(0 for _ in shape))

    out = pl.pallas_call(
        mlp_kernel,
        out_shape=jax.ShapeDtypeStruct((b_padded, out_pad), jnp.float32),
        grid=grid,
        in_specs=[
            pl.BlockSpec((tm, in_dim), lambda i: (i, 0)),   # x: tiled over batch
            resident(w1b.shape), resident(b1.shape),
            resident(w2b.shape), resident(b2.shape),
            resident(w3b.shape), resident(b3.shape),
        ],
        out_specs=pl.BlockSpec((tm, out_pad), lambda i: (i, 0)),
        compiler_params=pltpu.CompilerParams(
            dimension_semantics=("parallel",),
            vmem_limit_bytes=vmem_limit,
        ),
        cost_estimate=pl.CostEstimate(
            flops=flops,
            transcendentals=transcendentals,
            bytes_accessed=bytes_accessed,
        ),
    )(x, w1b, b1, w2b, b2, w3b, b3)

    # Strip batch / output-feature padding.
    return out[:B, :out_dim]


def init_params(key, in_dim, inter_dim, out_dim):
    """Deterministic synthetic parameters (PyTorch-Linear shaped, stored transposed)."""
    ks = jax.random.split(key, 6)
    w1 = jax.random.normal(ks[0], (in_dim, inter_dim), jnp.float32) * 0.05
    b1 = jax.random.normal(ks[1], (1, inter_dim), jnp.float32) * 0.05
    w2 = jax.random.normal(ks[2], (inter_dim, inter_dim), jnp.float32) * 0.05
    b2 = jax.random.normal(ks[3], (1, inter_dim), jnp.float32) * 0.05
    w3 = jax.random.normal(ks[4], (inter_dim, out_dim), jnp.float32) * 0.05
    b3 = jax.random.normal(ks[5], (1, out_dim), jnp.float32) * 0.05
    return w1, b1, w2, b2, w3, b3


def mlp_reference(x, w1, b1, w2, b2, w3, b3):
    h1 = jax.nn.sigmoid(x @ w1 + b1)
    h2 = jax.nn.sigmoid(h1 @ w2 + b2)
    return jax.nn.sigmoid(h2 @ w3 + b3)


if __name__ == "__main__":
    # Small shapes consistent with the module's forward: x is (B, C_in).
    B, in_dim, inter_dim, out_dim = 8, 32, 256, 16

    key = jax.random.PRNGKey(0)
    kx, kp = jax.random.split(key)
    x = jax.random.normal(kx, (B, in_dim), jnp.float32)
    params = init_params(kp, in_dim, inter_dim, out_dim)

    y = mlp_pallas(x, *params)
    y = jax.block_until_ready(y)

    y_ref = mlp_reference(x, *params)
    assert y.shape == (B, out_dim)
    # bf16 MXU operands with f32 accumulation -> slightly looser tolerance than pure f32.
    assert jnp.allclose(y, y_ref, atol=1e-2, rtol=1e-2), float(jnp.max(jnp.abs(y - y_ref)))

    print("KERNEL_OK")
</pallas_src>

<mosaic_0001>
module attributes {stable_mosaic.version = 11 : i64} {
  func.func @mlp_kernel(%arg0: i32, %arg1: memref<8x32xf32, #tpu.memory_space<vmem>>, %arg2: memref<32x256xbf16, #tpu.memory_space<vmem>>, %arg3: memref<1x256xf32, #tpu.memory_space<vmem>>, %arg4: memref<256x256xbf16, #tpu.memory_space<vmem>>, %arg5: memref<1x256xf32, #tpu.memory_space<vmem>>, %arg6: memref<256x128xbf16, #tpu.memory_space<vmem>>, %arg7: memref<1x128xf32, #tpu.memory_space<vmem>>, %arg8: memref<8x128xf32, #tpu.memory_space<vmem>>) attributes {dimension_semantics = [#tpu.dimension_semantics<parallel>], iteration_bounds = array<i64: 1>, scalar_prefetch = 0 : i64, scratch_operands = 0 : i64, tpu.core_type = #tpu.core_type<tc>, window_params = [{transform_indices = @transform_0, window_bounds = array<i64: 8, 32>}, {pipeline_mode = #tpu.pipeline_mode<synchronous>, transform_indices = @transform_1, window_bounds = array<i64: 32, 256>}, {pipeline_mode = #tpu.pipeline_mode<synchronous>, transform_indices = @transform_2, window_bounds = array<i64: 1, 256>}, {pipeline_mode = #tpu.pipeline_mode<synchronous>, transform_indices = @transform_3, window_bounds = array<i64: 256, 256>}, {pipeline_mode = #tpu.pipeline_mode<synchronous>, transform_indices = @transform_4, window_bounds = array<i64: 1, 256>}, {pipeline_mode = #tpu.pipeline_mode<synchronous>, transform_indices = @transform_5, window_bounds = array<i64: 256, 128>}, {pipeline_mode = #tpu.pipeline_mode<synchronous>, transform_indices = @transform_6, window_bounds = array<i64: 1, 128>}, {transform_indices = @transform_7, window_bounds = array<i64: 8, 128>}]} {
    %c0 = arith.constant 0 : index
    %c0_0 = arith.constant 0 : index
    %0 = vector.load %arg1[%c0, %c0_0] : memref<8x32xf32, #tpu.memory_space<vmem>>, vector<8x32xf32>
    %1 = arith.truncf %0 : vector<8x32xf32> to vector<8x32xbf16>
    %c0_1 = arith.constant 0 : index
    %c0_2 = arith.constant 0 : index
    %2 = vector.load %arg2[%c0_1, %c0_2] : memref<32x256xbf16, #tpu.memory_space<vmem>>, vector<32x256xbf16>
    %cst = arith.constant dense<0.000000e+00> : vector<8x256xf32>
    %3 = tpu.matmul %1, %2, %cst {dimension_numbers = #tpu.dot_dimension_numbers<[1], [0], [0], [1], [0, 0, 1, 1], [], []>} : vector<8x32xbf16>, vector<32x256xbf16>, vector<8x256xf32> -> vector<8x256xf32>
    %c0_3 = arith.constant 0 : index
    %c0_4 = arith.constant 0 : index
    %4 = vector.load %arg3[%c0_3, %c0_4] : memref<1x256xf32, #tpu.memory_space<vmem>>, vector<1x256xf32>
    %5 = vector.broadcast %4 : vector<1x256xf32> to vector<8x256xf32>
    %6 = arith.addf %3, %5 : vector<8x256xf32>
    %7 = arith.negf %6 : vector<8x256xf32>
    %8 = math.exp %7 : vector<8x256xf32>
    %cst_5 = arith.constant 1.000000e+00 : f32
    %9 = vector.broadcast %cst_5 : f32 to vector<8x256xf32>
    %10 = arith.addf %9, %8 : vector<8x256xf32>
    %11 = arith.divf %9, %10 : vector<8x256xf32>
    %12 = arith.truncf %11 : vector<8x256xf32> to vector<8x256xbf16>
    %c0_6 = arith.constant 0 : index
    %c0_7 = arith.constant 0 : index
    %13 = vector.load %arg4[%c0_6, %c0_7] : memref<256x256xbf16, #tpu.memory_space<vmem>>, vector<256x256xbf16>
    %cst_8 = arith.constant dense<0.000000e+00> : vector<8x256xf32>
    %14 = tpu.matmul %12, %13, %cst_8 {dimension_numbers = #tpu.dot_dimension_numbers<[1], [0], [0], [1], [0, 0, 1, 1], [], []>} : vector<8x256xbf16>, vector<256x256xbf16>, vector<8x256xf32> -> vector<8x256xf32>
    %c0_9 = arith.constant 0 : index
    %c0_10 = arith.constant 0 : index
    %15 = vector.load %arg5[%c0_9, %c0_10] : memref<1x256xf32, #tpu.memory_space<vmem>>, vector<1x256xf32>
    %16 = vector.broadcast %15 : vector<1x256xf32> to vector<8x256xf32>
    %17 = arith.addf %14, %16 : vector<8x256xf32>
    %18 = arith.negf %17 : vector<8x256xf32>
    %19 = math.exp %18 : vector<8x256xf32>
    %cst_11 = arith.constant 1.000000e+00 : f32
    %20 = vector.broadcast %cst_11 : f32 to vector<8x256xf32>
    %21 = arith.addf %20, %19 : vector<8x256xf32>
    %22 = arith.divf %20, %21 : vector<8x256xf32>
    %23 = arith.truncf %22 : vector<8x256xf32> to vector<8x256xbf16>
    %c0_12 = arith.constant 0 : index
    %c0_13 = arith.constant 0 : index
    %24 = vector.load %arg6[%c0_12, %c0_13] : memref<256x128xbf16, #tpu.memory_space<vmem>>, vector<256x128xbf16>
    %cst_14 = arith.constant dense<0.000000e+00> : vector<8x128xf32>
    %25 = tpu.matmul %23, %24, %cst_14 {dimension_numbers = #tpu.dot_dimension_numbers<[1], [0], [0], [1], [0, 0, 1, 1], [], []>} : vector<8x256xbf16>, vector<256x128xbf16>, vector<8x128xf32> -> vector<8x128xf32>
    %c0_15 = arith.constant 0 : index
    %c0_16 = arith.constant 0 : index
    %26 = vector.load %arg7[%c0_15, %c0_16] : memref<1x128xf32, #tpu.memory_space<vmem>>, vector<1x128xf32>
    %27 = vector.broadcast %26 : vector<1x128xf32> to vector<8x128xf32>
    %28 = arith.addf %25, %27 : vector<8x128xf32>
    %29 = arith.negf %28 : vector<8x128xf32>
    %30 = math.exp %29 : vector<8x128xf32>
    %cst_17 = arith.constant 1.000000e+00 : f32
    %31 = vector.broadcast %cst_17 : f32 to vector<8x128xf32>
    %32 = arith.addf %31, %30 : vector<8x128xf32>
    %33 = arith.divf %31, %32 : vector<8x128xf32>
    %c0_18 = arith.constant 0 : index
    %c0_19 = arith.constant 0 : index
    %34 = vector.load %arg8[%c0_18, %c0_19] : memref<8x128xf32, #tpu.memory_space<vmem>>, vector<8x128xf32>
    tpu.vector_store %arg8[%c0_18, %c0_19], %33 {strides = array<i32>} : memref<8x128xf32, #tpu.memory_space<vmem>>, vector<8x128xf32>,
    return
  }
  func.func @transform_0(%arg0: i32) -> (i32, i32) {
    %c0_i32 = arith.constant 0 : i32
    %c0_i32_0 = arith.constant 0 : i32
    return %arg0, %c0_i32 : i32, i32
  }
  func.func @transform_1(%arg0: i32) -> (i32, i32) {
    %c0_i32 = arith.constant 0 : i32
    %c0_i32_0 = arith.constant 0 : i32
    %c0_i32_1 = arith.constant 0 : i32
    return %c0_i32, %c0_i32_0 : i32, i32
  }
  func.func @transform_2(%arg0: i32) -> (i32, i32) {
    %c0_i32 = arith.constant 0 : i32
    %c0_i32_0 = arith.constant 0 : i32
    %c0_i32_1 = arith.constant 0 : i32
    return %c0_i32, %c0_i32_0 : i32, i32
  }
  func.func @transform_3(%arg0: i32) -> (i32, i32) {
    %c0_i32 = arith.constant 0 : i32
    %c0_i32_0 = arith.constant 0 : i32
    %c0_i32_1 = arith.constant 0 : i32
    return %c0_i32, %c0_i32_0 : i32, i32
  }
  func.func @transform_4(%arg0: i32) -> (i32, i32) {
    %c0_i32 = arith.constant 0 : i32
    %c0_i32_0 = arith.constant 0 : i32
    %c0_i32_1 = arith.constant 0 : i32
    return %c0_i32, %c0_i32_0 : i32, i32
  }
  func.func @transform_5(%arg0: i32) -> (i32, i32) {
    %c0_i32 = arith.constant 0 : i32
    %c0_i32_0 = arith.constant 0 : i32
    %c0_i32_1 = arith.constant 0 : i32
    return %c0_i32, %c0_i32_0 : i32, i32
  }
  func.func @transform_6(%arg0: i32) -> (i32, i32) {
    %c0_i32 = arith.constant 0 : i32
    %c0_i32_0 = arith.constant 0 : i32
    %c0_i32_1 = arith.constant 0 : i32
    return %c0_i32, %c0_i32_0 : i32, i32
  }
  func.func @transform_7(%arg0: i32) -> (i32, i32) {
    %c0_i32 = arith.constant 0 : i32
    %c0_i32_0 = arith.constant 0 : i32
    return %arg0, %c0_i32 : i32, i32
  }
}

</mosaic_0001>

<llo_original>
// kernel: mlp_pallas.1
$region0: #{mlp_pallas.1}
  #allocation0 [shape = 'u32[]', space=smem, size = 0x4, offset = 0x4, fixed_abs, tag = 'smem constant byte address 0x4 - core index']
  #allocation1 [shape = 'u32[72,128]{1,0:T(1,128)}', space=vmem, size = 0x9000, scoped, tag = 'internal scratch']
  %s0 = inlined_call_operand.vmem [shape: f32[8,32], index: 0, kind: input, shape index: {}]
  %s1 = inlined_call_operand.vmem [shape: bf16[32,256], index: 1, kind: input, shape index: {}]
  %s2 = inlined_call_operand.vmem [shape: f32[1,256], index: 2, kind: input, shape index: {}]
  %s3 = inlined_call_operand.vmem [shape: bf16[256,256], index: 3, kind: input, shape index: {}]
  %s4 = inlined_call_operand.vmem [shape: f32[1,256], index: 4, kind: input, shape index: {}]
  %s5 = inlined_call_operand.vmem [shape: bf16[256,128], index: 5, kind: input, shape index: {}]
  %s6 = inlined_call_operand.vmem [shape: f32[1,128], index: 6, kind: input, shape index: {}]
  %s7 = inlined_call_operand.hbm [shape: f32[8,128], index: 7, kind: output, shape index: {}]
  %s8 = sld [smem:[#allocation0]]
  $region38: #{mlp_pallas.1} parent=0
    _
  %s10 = ssub.s32 1, %s8
  %s11 = scalar_select 0, %s10, %s8
  $region1: #{mlp_pallas.1} parent=0
    #allocation2 [shape = 'u8[4096]{0}', space=vmem, size = 0x1000, scoped, tag = 'output window, operand 0, single buffered']
    #allocation3 [shape = 's32[1]{0}', space=sflag, size = 0x4, scoped, tag = 'scoped memory for mlp_pallas.1']
    %12 = vsyncpa [#allocation3], 0
    // Predicated region
    $region2: #{mlp_pallas.1} parent=1 // pred_check
      _
    $region3: #{mlp_pallas.1} parent=1 // pred_check_branch
      %14 = sbr.rel (0) target = $region5
    $region4: #{mlp_pallas.1} parent=1 // pred_region
      _
    $region5: #{mlp_pallas.1} parent=1 // pred_fallthru
      _
    // Predicated region
    $region6: #{mlp_pallas.1} parent=1 // pred_check
      _
    $region7: #{mlp_pallas.1} parent=1 // pred_check_branch
      %16 = sbr.rel (0) target = $region9
    $region8: #{mlp_pallas.1} parent=1 // pred_region
      _
    $region9: #{mlp_pallas.1} parent=1 // pred_fallthru
      _
    // Predicated region
    $region10: #{mlp_pallas.1} parent=1 // pred_check
      _
    $region11: #{mlp_pallas.1} parent=1 // pred_check_branch
      %18 = sbr.rel (0) target = $region13
    $region12: #{mlp_pallas.1} parent=1 // pred_region
      _
    $region13: #{mlp_pallas.1} parent=1 // pred_fallthru
      _
    // Predicated region
    $region14: #{mlp_pallas.1} parent=1 // pred_check
      _
    $region15: #{mlp_pallas.1} parent=1 // pred_check_branch
      %20 = sbr.rel (0) target = $region17
    $region16: #{mlp_pallas.1} parent=1 // pred_region
      _
    $region17: #{mlp_pallas.1} parent=1 // pred_fallthru
      _
    // Predicated region
    $region18: #{mlp_pallas.1} parent=1 // pred_check
      _
    $region19: #{mlp_pallas.1} parent=1 // pred_check_branch
      %22 = sbr.rel (0) target = $region21
    $region20: #{mlp_pallas.1} parent=1 // pred_region
      _
    $region21: #{mlp_pallas.1} parent=1 // pred_fallthru
      _
    // Predicated region
    $region22: #{mlp_pallas.1} parent=1 // pred_check
      _
    $region23: #{mlp_pallas.1} parent=1 // pred_check_branch
      %24 = sbr.rel (0) target = $region25
    $region24: #{mlp_pallas.1} parent=1 // pred_region
      _
    $region25: #{mlp_pallas.1} parent=1 // pred_fallthru
      _
    // Predicated region
    $region26: #{mlp_pallas.1} parent=1 // pred_check
      _
    $region27: #{mlp_pallas.1} parent=1 // pred_check_branch
      %26 = sbr.rel (0) target = $region29
    $region28: #{mlp_pallas.1} parent=1 // pred_region
      _
    $region29: #{mlp_pallas.1} parent=1 // pred_fallthru
      _
    %v28 = vld [vmem:[%s0] sm:$0xff]
    %v29 = vpack.c.bf16 %v28, %v28
    %v30 = vld [vmem:[%s1] sm:$0xff]
    %v31 = vld [vmem:[%s1 + $0x8] sm:$0xff]
    %v32 = vld [vmem:[%s1 + $0x10] sm:$0xff]
    %v33 = vld [vmem:[%s1 + $0x18] sm:$0xff]
    %v34 = vld [vmem:[%s2] sm:$0x3]
    %v36 = vperm.slane %v34, 0
    %v37 = vperm.slane %v34, 1
    %v44 = vunpack.c.l.b16 %v30
    %v45 = vunpack.c.h.b16 %v30
    %v46 = vunpack.c.l.b16 %v31
    %v47 = vunpack.c.h.b16 %v31
    %v48 = vunpack.c.l.b16 %v32
    %v49 = vunpack.c.h.b16 %v32
    %v50 = vunpack.c.l.b16 %v33
    %v51 = vunpack.c.h.b16 %v33
    %v52 = vpack.c.b16 %v46, %v44
    %v53 = vpack.c.b16 %v47, %v45
    %v54 = vpack.c.b16 %v50, %v48
    %v55 = vpack.c.b16 %v51, %v49
    %vm60 = vcmask 261120
    %v62 = vsel %vm60, %v29, 0
    %64 = vmatpush.bf16.msra.mxu0 0
    %65 = vmatpush.bf16.msra.mxu0 0
    %66 = vmatpush.bf16.msra.mxu0 0
    %67 = vmatpush.bf16.msra.mxu0 0
    %68 = vmatpush.bf16.msra.mxu0 0
    %69 = vmatpush.bf16.msra.mxu0 0
    %70 = vmatpush.bf16.msra.mxu0 %v54
    %71 = vmatpush.bf16.msra.mxu0 %v52
    %72 = vmatmul.bf16.gmra.mxu0 %v62
    %v73 = vpop.f32.mrf.mxu0
    %v74 = vadd.f32 %v36, %v73
    %v75 = vpop.f32.mrf.mxu0
    %76 = vdwg.mxu0
    %77 = vmatpush.bf16.msra.mxu0 0
    %78 = vmatpush.bf16.msra.mxu0 0
    %79 = vmatpush.bf16.msra.mxu0 0
    %80 = vmatpush.bf16.msra.mxu0 0
    %81 = vmatpush.bf16.msra.mxu0 0
    %82 = vmatpush.bf16.msra.mxu0 0
    %83 = vmatpush.bf16.msra.mxu0 %v55
    %84 = vmatpush.bf16.msra.mxu0 %v53
    %85 = vmatmul.bf16.gmra.mxu0 %v62
    %v86 = vpop.f32.mrf.mxu0
    %v87 = vadd.f32 %v37, %v86
    %v88 = vpop.f32.mrf.mxu0
    %89 = vdwg.mxu0
    %v90 = vxor.u32 %v74, 2147483648
    %v91 = vxor.u32 %v87, 2147483648
    %v92 = vmul.f32 %v90, 1.442695
    %v93 = vpow.pop %v92
    %v94 = vmul.f32 %v91, 1.442695
    %v95 = vpow.pop %v94
    %v96 = vadd.f32 %v93, 1.0
    %v97 = vadd.f32 %v95, 1.0
    %v98 = vrcp.pop %v96
    %v99 = vmul.f32 %v96, %v98
    %v100 = vsub.f32 1.0, %v99
    %v101 = vmul.f32 %v98, %v100
    %v102 = vadd.f32 %v98, %v101
    %vm103 = vweird.f32 %v96
    %vm104 = vweird.f32 %v98
    %vm105 = vmor %vm103, %vm104
    %v106 = vsel %vm105, %v98, %v102
    %v107 = vand.u32 2147483647, %v96
    %vm108 = vcmp.eq.f32.partialorder %v107, 8.507059e+37
    %v109 = vand.u32 %v96, 2147483648
    %v110 = vor.u32 1.1754944e-38, %v109
    %v111 = vsel %vm108, %v110, %v106
    %v112 = vmul.f32 1.0, %v111
    %v113 = vrcp.pop %v97
    %v114 = vmul.f32 %v97, %v113
    %v115 = vsub.f32 1.0, %v114
    %v116 = vmul.f32 %v113, %v115
    %v117 = vadd.f32 %v113, %v116
    %vm118 = vweird.f32 %v97
    %vm119 = vweird.f32 %v113
    %vm120 = vmor %vm118, %vm119
    %v121 = vsel %vm120, %v113, %v117
    %v122 = vand.u32 2147483647, %v97
    %vm123 = vcmp.eq.f32.partialorder %v122, 8.507059e+37
    %v124 = vand.u32 %v97, 2147483648
    %v125 = vor.u32 1.1754944e-38, %v124
    %v126 = vsel %vm123, %v125, %v121
    %v127 = vmul.f32 1.0, %v126
    %v128 = vpack.c.bf16 %v112, %v112
    %v129 = vpack.c.bf16 %v127, %v127
    %v130 = vld [vmem:[%s3] sm:$0xff]
    %v131 = vld [vmem:[%s3 + $0x8] sm:$0xff]
    %v132 = vld [vmem:[%s3 + $0x10] sm:$0xff]
    %v133 = vld [vmem:[%s3 + $0x18] sm:$0xff]
    %v134 = vld [vmem:[%s3 + $0x20] sm:$0xff]
    %v135 = vld [vmem:[%s3 + $0x28] sm:$0xff]
    %v136 = vld [vmem:[%s3 + $0x30] sm:$0xff]
    %v137 = vld [vmem:[%s3 + $0x38] sm:$0xff]
    %v138 = vld [vmem:[%s3 + $0x40] sm:$0xff]
    %v139 = vld [vmem:[%s3 + $0x48] sm:$0xff]
    %v140 = vld [vmem:[%s3 + $0x50] sm:$0xff]
    %v141 = vld [vmem:[%s3 + $0x58] sm:$0xff]
    %v142 = vld [vmem:[%s3 + $0x60] sm:$0xff]
    %v143 = vld [vmem:[%s3 + $0x68] sm:$0xff]
    %v144 = vld [vmem:[%s3 + $0x70] sm:$0xff]
    %v145 = vld [vmem:[%s3 + $0x78] sm:$0xff]
    %v146 = vld [vmem:[%s3 + $0x80] sm:$0xff]
    %v147 = vld [vmem:[%s3 + $0x88] sm:$0xff]
    %v148 = vld [vmem:[%s3 + $0x90] sm:$0xff]
    %v149 = vld [vmem:[%s3 + $0x98] sm:$0xff]
    %v150 = vld [vmem:[%s3 + $0xa0] sm:$0xff]
    %v151 = vld [vmem:[%s3 + $0xa8] sm:$0xff]
    %v152 = vld [vmem:[%s3 + $0xb0] sm:$0xff]
    %v153 = vld [vmem:[%s3 + $0xb8] sm:$0xff]
    %v154 = vld [vmem:[%s3 + $0xc0] sm:$0xff]
    %v155 = vld [vmem:[%s3 + $0xc8] sm:$0xff]
    %v156 = vld [vmem:[%s3 + $0xd0] sm:$0xff]
    %v157 = vld [vmem:[%s3 + $0xd8] sm:$0xff]
    %v158 = vld [vmem:[%s3 + $0xe0] sm:$0xff]
    %v159 = vld [vmem:[%s3 + $0xe8] sm:$0xff]
    %v160 = vld [vmem:[%s3 + $0xf0] sm:$0xff]
    %v161 = vld [vmem:[%s3 + $0xf8] sm:$0xff]
    %v162 = vld [vmem:[%s4] sm:$0x3]
    %v164 = vperm.slane %v162, 0
    %v165 = vperm.slane %v162, 1
    %v200 = vunpack.c.l.b16 %v130
    %v201 = vunpack.c.h.b16 %v130
    %v202 = vunpack.c.l.b16 %v131
    %v203 = vunpack.c.h.b16 %v131
    %v204 = vunpack.c.l.b16 %v132
    %v205 = vunpack.c.h.b16 %v132
    %v206 = vunpack.c.l.b16 %v133
    %v207 = vunpack.c.h.b16 %v133
    %v208 = vunpack.c.l.b16 %v134
    %v209 = vunpack.c.h.b16 %v134
    %v210 = vunpack.c.l.b16 %v135
    %v211 = vunpack.c.h.b16 %v135
    %v212 = vunpack.c.l.b16 %v136
    %v213 = vunpack.c.h.b16 %v136
    %v214 = vunpack.c.l.b16 %v137
    %v215 = vunpack.c.h.b16 %v137
    %v216 = vunpack.c.l.b16 %v138
    %v217 = vunpack.c.h.b16 %v138
    %v218 = vunpack.c.l.b16 %v139
    %v219 = vunpack.c.h.b16 %v139
    %v220 = vunpack.c.l.b16 %v140
    %v221 = vunpack.c.h.b16 %v140
    %v222 = vunpack.c.l.b16 %v141
    %v223 = vunpack.c.h.b16 %v141
    %v224 = vunpack.c.l.b16 %v142
    %v225 = vunpack.c.h.b16 %v142
    %v226 = vunpack.c.l.b16 %v143
    %v227 = vunpack.c.h.b16 %v143
    %v228 = vunpack.c.l.b16 %v144
    %v229 = vunpack.c.h.b16 %v144
    %v230 = vunpack.c.l.b16 %v145
    %v231 = vunpack.c.h.b16 %v145
    %v232 = vunpack.c.l.b16 %v146
    %v233 = vunpack.c.h.b16 %v146
    %v234 = vunpack.c.l.b16 %v147
    %v235 = vunpack.c.h.b16 %v147
    %v236 = vunpack.c.l.b16 %v148
    %v237 = vunpack.c.h.b16 %v148
    %v238 = vunpack.c.l.b16 %v149
    %v239 = vunpack.c.h.b16 %v149
    %v240 = vunpack.c.l.b16 %v150
    %v241 = vunpack.c.h.b16 %v150
    %v242 = vunpack.c.l.b16 %v151
    %v243 = vunpack.c.h.b16 %v151
    %v244 = vunpack.c.l.b16 %v152
    %v245 = vunpack.c.h.b16 %v152
    %v246 = vunpack.c.l.b16 %v153
    %v247 = vunpack.c.h.b16 %v153
    %v248 = vunpack.c.l.b16 %v154
    %v249 = vunpack.c.h.b16 %v154
    %v250 = vunpack.c.l.b16 %v155
    %v251 = vunpack.c.h.b16 %v155
    %v252 = vunpack.c.l.b16 %v156
    %v253 = vunpack.c.h.b16 %v156
    %v254 = vunpack.c.l.b16 %v157
    %v255 = vunpack.c.h.b16 %v157
    %v256 = vunpack.c.l.b16 %v158
    %v257 = vunpack.c.h.b16 %v158
    %v258 = vunpack.c.l.b16 %v159
    %v259 = vunpack.c.h.b16 %v159
    %v260 = vunpack.c.l.b16 %v160
    %v261 = vunpack.c.h.b16 %v160
    %v262 = vunpack.c.l.b16 %v161
    %v263 = vunpack.c.h.b16 %v161
    %v264 = vpack.c.b16 %v202, %v200
    %v265 = vpack.c.b16 %v203, %v201
    %v266 = vpack.c.b16 %v206, %v204
    %v267 = vpack.c.b16 %v207, %v205
    %v268 = vpack.c.b16 %v210, %v208
    %v269 = vpack.c.b16 %v211, %v209
    %v270 = vpack.c.b16 %v214, %v212
    %v271 = vpack.c.b16 %v215, %v213
    %v272 = vpack.c.b16 %v218, %v216
    %v273 = vpack.c.b16 %v219, %v217
    %v274 = vpack.c.b16 %v222, %v220
    %v275 = vpack.c.b16 %v223, %v221
    %v276 = vpack.c.b16 %v226, %v224
    %v277 = vpack.c.b16 %v227, %v225
    %v278 = vpack.c.b16 %v230, %v228
    %v279 = vpack.c.b16 %v231, %v229
    %v280 = vpack.c.b16 %v234, %v232
    %v281 = vpack.c.b16 %v235, %v233
    %v282 = vpack.c.b16 %v238, %v236
    %v283 = vpack.c.b16 %v239, %v237
    %v284 = vpack.c.b16 %v242, %v240
    %v285 = vpack.c.b16 %v243, %v241
    %v286 = vpack.c.b16 %v246, %v244
    %v287 = vpack.c.b16 %v247, %v245
    %v288 = vpack.c.b16 %v250, %v248
    %v289 = vpack.c.b16 %v251, %v249
    %v290 = vpack.c.b16 %v254, %v252
    %v291 = vpack.c.b16 %v255, %v253
    %v292 = vpack.c.b16 %v258, %v256
    %v293 = vpack.c.b16 %v259, %v257
    %v294 = vpack.c.b16 %v262, %v260
    %v295 = vpack.c.b16 %v263, %v261
    %328 = vmatpush.bf16.msra.mxu0 %v278
    %329 = vmatpush.bf16.msra.mxu0 %v276
    %330 = vmatpush.bf16.msra.mxu0 %v274
    %331 = vmatpush.bf16.msra.mxu0 %v272
    %332 = vmatpush.bf16.msra.mxu0 %v270
    %333 = vmatpush.bf16.msra.mxu0 %v268
    %334 = vmatpush.bf16.msra.mxu0 %v266
    %335 = vmatpush.bf16.msra.mxu0 %v264
    %336 = vmatmul.bf16.gmra.mxu0 %v128
    %v337 = vpop.f32.mrf.mxu0
    %v338 = vadd.f32 %v164, %v337
    %v339 = vpop.f32.mrf.mxu0
    %340 = vdwg.mxu0
    %341 = vmatpush.bf16.msra.mxu0 %v294
    %342 = vmatpush.bf16.msra.mxu0 %v292
    %343 = vmatpush.bf16.msra.mxu0 %v290
    %344 = vmatpush.bf16.msra.mxu0 %v288
    %345 = vmatpush.bf16.msra.mxu0 %v286
    %346 = vmatpush.bf16.msra.mxu0 %v284
    %347 = vmatpush.bf16.msra.mxu0 %v282
    %348 = vmatpush.bf16.msra.mxu0 %v280
    %349 = vmatmul.bf16.gmra.mxu0 %v129
    %v350 = vpop.f32.mrf.mxu0
    %v351 = vadd.f32 %v338, %v350
    %v352 = vpop.f32.mrf.mxu0
    %353 = vdwg.mxu0
    %354 = vmatpush.bf16.msra.mxu0 %v279
    %355 = vmatpush.bf16.msra.mxu0 %v277
    %356 = vmatpush.bf16.msra.mxu0 %v275
    %357 = vmatpush.bf16.msra.mxu0 %v273
    %358 = vmatpush.bf16.msra.mxu0 %v271
    %359 = vmatpush.bf16.msra.mxu0 %v269
    %360 = vmatpush.bf16.msra.mxu0 %v267
    %361 = vmatpush.bf16.msra.mxu0 %v265
    %362 = vmatmul.bf16.gmra.mxu0 %v128
    %v363 = vpop.f32.mrf.mxu0
    %v364 = vadd.f32 %v165, %v363
    %v365 = vpop.f32.mrf.mxu0
    %366 = vdwg.mxu0
    %367 = vmatpush.bf16.msra.mxu0 %v295
    %368 = vmatpush.bf16.msra.mxu0 %v293
    %369 = vmatpush.bf16.msra.mxu0 %v291
    %370 = vmatpush.bf16.msra.mxu0 %v289
    %371 = vmatpush.bf16.msra.mxu0 %v287
    %372 = vmatpush.bf16.msra.mxu0 %v285
    %373 = vmatpush.bf16.msra.mxu0 %v283
    %374 = vmatpush.bf16.msra.mxu0 %v281
    %375 = vmatmul.bf16.gmra.mxu0 %v129
    %v376 = vpop.f32.mrf.mxu0
    %v377 = vadd.f32 %v364, %v376
    %v378 = vpop.f32.mrf.mxu0
    %379 = vdwg.mxu0
    %v380 = vxor.u32 %v351, 2147483648
    %v381 = vxor.u32 %v377, 2147483648
    %v382 = vmul.f32 %v380, 1.442695
    %v383 = vpow.pop %v382
    %v384 = vmul.f32 %v381, 1.442695
    %v385 = vpow.pop %v384
    %v386 = vadd.f32 %v383, 1.0
    %v387 = vadd.f32 %v385, 1.0
    %v388 = vrcp.pop %v386
    %v389 = vmul.f32 %v386, %v388
    %v390 = vsub.f32 1.0, %v389
    %v391 = vmul.f32 %v388, %v390
    %v392 = vadd.f32 %v388, %v391
    %vm393 = vweird.f32 %v386
    %vm394 = vweird.f32 %v388
    %vm395 = vmor %vm393, %vm394
    %v396 = vsel %vm395, %v388, %v392
    %v397 = vand.u32 2147483647, %v386
    %vm398 = vcmp.eq.f32.partialorder %v397, 8.507059e+37
    %v399 = vand.u32 %v386, 2147483648
    %v400 = vor.u32 1.1754944e-38, %v399
    %v401 = vsel %vm398, %v400, %v396
    %v402 = vmul.f32 1.0, %v401
    %v403 = vrcp.pop %v387
    %v404 = vmul.f32 %v387, %v403
    %v405 = vsub.f32 1.0, %v404
    %v406 = vmul.f32 %v403, %v405
    %v407 = vadd.f32 %v403, %v406
    %vm408 = vweird.f32 %v387
    %vm409 = vweird.f32 %v403
    %vm410 = vmor %vm408, %vm409
    %v411 = vsel %vm410, %v403, %v407
    %v412 = vand.u32 2147483647, %v387
    %vm413 = vcmp.eq.f32.partialorder %v412, 8.507059e+37
    %v414 = vand.u32 %v387, 2147483648
    %v415 = vor.u32 1.1754944e-38, %v414
    %v416 = vsel %vm413, %v415, %v411
    %v417 = vmul.f32 1.0, %v416
    %v418 = vpack.c.bf16 %v402, %v402
    %v419 = vpack.c.bf16 %v417, %v417
    %v420 = vld [vmem:[%s5] sm:$0xf]
    %v421 = vld [vmem:[%s5 + $0x4] sm:$0xf]
    %v422 = vld [vmem:[%s5 + $0x8] sm:$0xf]
    %v423 = vld [vmem:[%s5 + $0xc] sm:$0xf]
    %v424 = vld [vmem:[%s5 + $0x10] sm:$0xf]
    %v425 = vld [vmem:[%s5 + $0x14] sm:$0xf]
    %v426 = vld [vmem:[%s5 + $0x18] sm:$0xf]
    %v427 = vld [vmem:[%s5 + $0x1c] sm:$0xf]
    %v428 = vld [vmem:[%s5 + $0x20] sm:$0xf]
    %v429 = vld [vmem:[%s5 + $0x24] sm:$0xf]
    %v430 = vld [vmem:[%s5 + $0x28] sm:$0xf]
    %v431 = vld [vmem:[%s5 + $0x2c] sm:$0xf]
    %v432 = vld [vmem:[%s5 + $0x30] sm:$0xf]
    %v433 = vld [vmem:[%s5 + $0x34] sm:$0xf]
    %v434 = vld [vmem:[%s5 + $0x38] sm:$0xf]
    %v435 = vld [vmem:[%s5 + $0x3c] sm:$0xf]
    %v436 = vld [vmem:[%s5 + $0x40] sm:$0xf]
    %v437 = vld [vmem:[%s5 + $0x44] sm:$0xf]
    %v438 = vld [vmem:[%s5 + $0x48] sm:$0xf]
    %v439 = vld [vmem:[%s5 + $0x4c] sm:$0xf]
    %v440 = vld [vmem:[%s5 + $0x50] sm:$0xf]
    %v441 = vld [vmem:[%s5 + $0x54] sm:$0xf]
    %v442 = vld [vmem:[%s5 + $0x58] sm:$0xf]
    %v443 = vld [vmem:[%s5 + $0x5c] sm:$0xf]
    %v444 = vld [vmem:[%s5 + $0x60] sm:$0xf]
    %v445 = vld [vmem:[%s5 + $0x64] sm:$0xf]
    %v446 = vld [vmem:[%s5 + $0x68] sm:$0xf]
    %v447 = vld [vmem:[%s5 + $0x6c] sm:$0xf]
    %v448 = vld [vmem:[%s5 + $0x70] sm:$0xf]
    %v449 = vld [vmem:[%s5 + $0x74] sm:$0xf]
    %v450 = vld [vmem:[%s5 + $0x78] sm:$0xf]
    %v451 = vld [vmem:[%s5 + $0x7c] sm:$0xf]
    %v452 = vld [vmem:[%s6] sm:$0x1]
    %v454 = vperm.slane %v452, 0
    %v488 = vunpack.c.l.b16 %v420
    %v489 = vunpack.c.l.b16 %v421
    %v490 = vunpack.c.l.b16 %v422
    %v491 = vunpack.c.l.b16 %v423
    %v492 = vunpack.c.l.b16 %v424
    %v493 = vunpack.c.l.b16 %v425
    %v494 = vunpack.c.l.b16 %v426
    %v495 = vunpack.c.l.b16 %v427
    %v496 = vunpack.c.l.b16 %v428
    %v497 = vunpack.c.l.b16 %v429
    %v498 = vunpack.c.l.b16 %v430
    %v499 = vunpack.c.l.b16 %v431
    %v500 = vunpack.c.l.b16 %v432
    %v501 = vunpack.c.l.b16 %v433
    %v502 = vunpack.c.l.b16 %v434
    %v503 = vunpack.c.l.b16 %v435
    %v504 = vunpack.c.l.b16 %v436
    %v505 = vunpack.c.l.b16 %v437
    %v506 = vunpack.c.l.b16 %v438
    %v507 = vunpack.c.l.b16 %v439
    %v508 = vunpack.c.l.b16 %v440
    %v509 = vunpack.c.l.b16 %v441
    %v510 = vunpack.c.l.b16 %v442
    %v511 = vunpack.c.l.b16 %v443
    %v512 = vunpack.c.l.b16 %v444
    %v513 = vunpack.c.l.b16 %v445
    %v514 = vunpack.c.l.b16 %v446
    %v515 = vunpack.c.l.b16 %v447
    %v516 = vunpack.c.l.b16 %v448
    %v517 = vunpack.c.l.b16 %v449
    %v518 = vunpack.c.l.b16 %v450
    %v519 = vunpack.c.l.b16 %v451
    %v520 = vpack.c.b16 %v489, %v488
    %v521 = vpack.c.b16 %v491, %v490
    %v522 = vpack.c.b16 %v493, %v492
    %v523 = vpack.c.b16 %v495, %v494
    %v524 = vpack.c.b16 %v497, %v496
    %v525 = vpack.c.b16 %v499, %v498
    %v526 = vpack.c.b16 %v501, %v500
    %v527 = vpack.c.b16 %v503, %v502
    %v528 = vpack.c.b16 %v505, %v504
    %v529 = vpack.c.b16 %v507, %v506
    %v530 = vpack.c.b16 %v509, %v508
    %v531 = vpack.c.b16 %v511, %v510
    %v532 = vpack.c.b16 %v513, %v512
    %v533 = vpack.c.b16 %v515, %v514
    %v534 = vpack.c.b16 %v517, %v516
    %v535 = vpack.c.b16 %v519, %v518
    %552 = vmatpush.bf16.msra.mxu0 %v527
    %553 = vmatpush.bf16.msra.mxu0 %v526
    %554 = vmatpush.bf16.msra.mxu0 %v525
    %555 = vmatpush.bf16.msra.mxu0 %v524
    %556 = vmatpush.bf16.msra.mxu0 %v523
    %557 = vmatpush.bf16.msra.mxu0 %v522
    %558 = vmatpush.bf16.msra.mxu0 %v521
    %559 = vmatpush.bf16.msra.mxu0 %v520
    %560 = vmatmul.bf16.gmra.mxu0 %v418
    %v561 = vpop.f32.mrf.mxu0
    %v562 = vadd.f32 %v454, %v561
    %v563 = vpop.f32.mrf.mxu0
    %564 = vdwg.mxu0
    %565 = vmatpush.bf16.msra.mxu0 %v535
    %566 = vmatpush.bf16.msra.mxu0 %v534
    %567 = vmatpush.bf16.msra.mxu0 %v533
    %568 = vmatpush.bf16.msra.mxu0 %v532
    %569 = vmatpush.bf16.msra.mxu0 %v531
    %570 = vmatpush.bf16.msra.mxu0 %v530
    %571 = vmatpush.bf16.msra.mxu0 %v529
    %572 = vmatpush.bf16.msra.mxu0 %v528
    %573 = vmatmul.bf16.gmra.mxu0 %v419
    %v574 = vpop.f32.mrf.mxu0
    %v575 = vadd.f32 %v562, %v574
    %v576 = vpop.f32.mrf.mxu0
    %577 = vdwg.mxu0
    %v578 = vxor.u32 %v575, 2147483648
    %v579 = vmul.f32 %v578, 1.442695
    %v580 = vpow.pop %v579
    %v581 = vadd.f32 %v580, 1.0
    %v582 = vrcp.pop %v581
    %v583 = vmul.f32 %v581, %v582
    %v584 = vsub.f32 1.0, %v583
    %v585 = vmul.f32 %v582, %v584
    %v586 = vadd.f32 %v582, %v585
    %vm587 = vweird.f32 %v581
    %vm588 = vweird.f32 %v582
    %vm589 = vmor %vm587, %vm588
    %v590 = vsel %vm589, %v582, %v586
    %v591 = vand.u32 2147483647, %v581
    %vm592 = vcmp.eq.f32.partialorder %v591, 8.507059e+37
    %v593 = vand.u32 %v581, 2147483648
    %v594 = vor.u32 1.1754944e-38, %v593
    %v595 = vsel %vm592, %v594, %v590
    %v596 = vmul.f32 1.0, %v595
    %597 = vst [vmem:[#allocation2] sm:$0xff] %v596
    // Predicated region
    $region30: #{mlp_pallas.1} parent=1 // pred_check
      _
    $region31: #{mlp_pallas.1} parent=1 // pred_check_branch
      %599 = sbr.rel (0) target = $region33
    $region32: #{mlp_pallas.1} parent=1 // pred_region
      %601 = vsyncadd [#allocation3], 0
      %s603 = sshll.u32 [#allocation2], 4
      %s604 = int_to_ptr.vmem [resolvable:$true] %s603
      %s605 = sshll.u32 %s7, 4
      %s606 = int_to_ptr.hbm [resolvable:$true] %s605
      %608 = dma.vmem_to_hbm [thread:$0]  %s604, 128, %s606, [#allocation3]
    $region33: #{mlp_pallas.1} parent=1 // pred_fallthru
      _
    // Predicated region
    $region34: #{mlp_pallas.1} parent=1 // pred_check
      _
    $region35: #{mlp_pallas.1} parent=1 // pred_check_branch
      %610 = sbr.rel (0) target = $region37
    $region36: #{mlp_pallas.1} parent=1 // pred_region
      %612 = dma.done [#allocation3], 128
    $region37: #{mlp_pallas.1} parent=1 // pred_fallthru
      _
    %613 = vsyncpa [#allocation3], 1

</llo_original>
